<compile_context>
chip_gen: v7x
topology: tpu7x:2x2x1
jax: 0.10.0
libtpu: 0.0.40
codegen_flags: <defaults>
</compile_context>

<pallas_src>
import functools
import math

import jax
import jax.numpy as jnp
import numpy as np
from jax.experimental import pallas as pl
from jax.experimental.pallas import tpu as pltpu

INV_SQRT2 = 1.0 / math.sqrt(2.0)


# ---------------------------------------------------------------------------
# Fused kernel (one grid step = one batch element)
# ---------------------------------------------------------------------------

def fused_block_kernel(x_ref, proj_ref, a_ref, wt_ref, bt_ref, wf_ref, bf_ref,
                       wm_ref, bm_ref, wo_ref, bo_ref, res_ref, skip_ref,
                       *, apply_time, apply_feature):
    """Whole residual block for one batch element; all intermediates in VMEM.

    x_ref:    (1, C, M)  input, channel-major, M = J*L on the lane axis
    proj_ref: (1, C, 1)  diffusion projection (precomputed in the wrapper)
    a_ref:    (M, M)     kron(adj^T, I_L)   -> right-multiply adjacency (both GCNs)
    wt_ref:   (M, M)     kron(I_J, W_time)  -> right-multiply time weight
    bt_ref:   (1, M)     time bias replicated over joints
    wf_ref:   (C, C)     W_feat^T           -> left-multiply feature weight
    bf_ref:   (C, 1)     feature bias
    wm/bm, wo/bo:        1x1-conv mid / output projections
    """
    C = x_ref.shape[1]
    x = x_ref[0]                                        # (C, M)
    y = x + proj_ref[0]                                 # (C, 1) broadcast over M

    # time GCN: relu(adj @ Y_{b,c}(J,L) @ W_t + b_t), batched over channels.
    if apply_time:
        agg = jnp.dot(y, a_ref[...], preferred_element_type=jnp.float32)      # (C, M)
        y = jnp.maximum(
            jnp.dot(agg, wt_ref[...], preferred_element_type=jnp.float32)
            + bt_ref[...], 0.0)

    # feature GCN: relu(adj @ Y_{b,l}(J,C) @ W_f + b_f), batched over time steps.
    if apply_feature:
        agg = jnp.dot(y, a_ref[...], preferred_element_type=jnp.float32)      # (C, M)
        y = jnp.maximum(
            jnp.dot(wf_ref[...], agg, preferred_element_type=jnp.float32)
            + bf_ref[...], 0.0)

    # mid projection -> gate/filter -> output projection -> residual/skip.
    z = jnp.dot(wm_ref[...], y, preferred_element_type=jnp.float32) + bm_ref[...]  # (2C, M)
    h = jax.nn.sigmoid(z[:C]) * jnp.tanh(z[C:])
    w = jnp.dot(wo_ref[...], h, preferred_element_type=jnp.float32) + bo_ref[...]  # (2C, M)
    res_ref[...] = ((x + w[:C]) * INV_SQRT2)[None]
    skip_ref[...] = w[C:][None]


# ---------------------------------------------------------------------------
# Wrapper
# ---------------------------------------------------------------------------

def gcn_residual_block_forward(params, x, diffusion_emb):
    B, C, J, L = x.shape
    M = J * L
    f32 = jnp.float32
    x_flat = x.reshape(B, C, M)

    # Hoisted diffusion projection: (B, E) @ (E, C) + b -> (B, C, 1).
    proj = (diffusion_emb @ params["w_dp"].T + params["b_dp"][:, 0]).reshape(B, C, 1)

    # Token-space (M x M) operators: both graph convolutions become plain
    # lane-dense 2-D matmuls on the (C, M) tile (no in-kernel transposes).
    eye_l = jnp.eye(L, dtype=f32)
    eye_j = jnp.eye(J, dtype=f32)
    a_right = jnp.kron(params["adj"].T, eye_l)                    # (M, M)
    wt_right = jnp.kron(eye_j, params["w_time"])                  # (M, M)
    bt_row = jnp.tile(params["b_time"].reshape(1, L), (1, J))     # (1, M)
    wf_left = params["w_feat"].T                                  # (C, C)
    bf_col = params["b_feat"].reshape(C, 1)                       # (C, 1)

    kernel = functools.partial(fused_block_kernel,
                               apply_time=(L != 1), apply_feature=(J != 1))

    res, skip = pl.pallas_call(
        kernel,
        out_shape=(jax.ShapeDtypeStruct((B, C, M), f32),
                   jax.ShapeDtypeStruct((B, C, M), f32)),
        grid=(B,),
        in_specs=[
            pl.BlockSpec((1, C, M), lambda b: (b, 0, 0)),     # x
            pl.BlockSpec((1, C, 1), lambda b: (b, 0, 0)),     # proj
            pl.BlockSpec((M, M), lambda b: (0, 0)),           # a_right
            pl.BlockSpec((M, M), lambda b: (0, 0)),           # wt_right
            pl.BlockSpec((1, M), lambda b: (0, 0)),           # bt_row
            pl.BlockSpec((C, C), lambda b: (0, 0)),           # wf_left
            pl.BlockSpec((C, 1), lambda b: (0, 0)),           # bf_col
            pl.BlockSpec((2 * C, C), lambda b: (0, 0)),       # w_mid
            pl.BlockSpec((2 * C, 1), lambda b: (0, 0)),       # b_mid
            pl.BlockSpec((2 * C, C), lambda b: (0, 0)),       # w_out
            pl.BlockSpec((2 * C, 1), lambda b: (0, 0)),       # b_out
        ],
        out_specs=(
            pl.BlockSpec((1, C, M), lambda b: (b, 0, 0)),
            pl.BlockSpec((1, C, M), lambda b: (b, 0, 0)),
        ),
        compiler_params=pltpu.CompilerParams(dimension_semantics=("parallel",)),
    )(x_flat, proj, a_right, wt_right, bt_row, wf_left, bf_col,
      params["w_mid"], params["b_mid"], params["w_out"], params["b_out"])

    return res.reshape(B, C, J, L), skip.reshape(B, C, J, L)


# ---------------------------------------------------------------------------
# Pure-JAX reference (mirrors the PyTorch module) for a correctness check
# ---------------------------------------------------------------------------

def reference_forward(params, x, diffusion_emb):
    B, C, J, L = x.shape
    M = J * L
    x_flat = x.reshape(B, C, M)
    proj = diffusion_emb @ params["w_dp"].T + params["b_dp"][:, 0]         # (B, C)
    y = x_flat + proj[:, :, None]
    if L != 1:
        yt = y.reshape(B * C, J, L)
        yt = jax.nn.relu(jnp.einsum("jk,nkl->njl", params["adj"], yt)
                         @ params["w_time"] + params["b_time"])
        y = yt.reshape(B, C, M)
    if J != 1:
        yf = y.reshape(B, C, J, L).transpose(0, 3, 2, 1).reshape(B * L, J, C)
        yf = jax.nn.relu(jnp.einsum("jk,nkc->njc", params["adj"], yf)
                         @ params["w_feat"] + params["b_feat"])
        y = yf.reshape(B, L, J, C).transpose(0, 3, 2, 1).reshape(B, C, M)
    z = jnp.einsum("oc,bcm->bom", params["w_mid"], y) + params["b_mid"][None]
    h = jax.nn.sigmoid(z[:, :C]) * jnp.tanh(z[:, C:])
    w = jnp.einsum("oc,bcm->bom", params["w_out"], h) + params["b_out"][None]
    res = (x_flat + w[:, :C]) * INV_SQRT2
    return res.reshape(x.shape), w[:, C:].reshape(x.shape)


# ---------------------------------------------------------------------------
# Deterministic parameter construction
# ---------------------------------------------------------------------------

def make_params(key, channels, seq_len, diffusion_embedding_dim, n_joints):
    keys = jax.random.split(key, 8)
    C, L, E, J = channels, seq_len, diffusion_embedding_dim, n_joints

    # normalized chain-graph adjacency with self loops: D^{-1/2}(A+I)D^{-1/2}
    a = jnp.zeros((J, J), jnp.float32)
    idx = jnp.arange(J - 1)
    a = a.at[idx, idx + 1].set(1.0).at[idx + 1, idx].set(1.0)
    a = a + jnp.eye(J, dtype=jnp.float32)
    dinv = 1.0 / jnp.sqrt(a.sum(-1))
    adj = a * dinv[:, None] * dinv[None, :]

    def kaiming(k, shape, fan_in):
        return jax.random.normal(k, shape, jnp.float32) * math.sqrt(2.0 / fan_in)

    return {
        "adj": adj,
        # diffusion_projection: nn.Linear(E, C) (torch weight layout (C, E))
        "w_dp": jax.random.normal(keys[0], (C, E), jnp.float32) / math.sqrt(E),
        "b_dp": jnp.zeros((C, 1), jnp.float32),
        # time_layer GCN: input_dim = output_dim = seq_len
        "w_time": kaiming(keys[1], (L, L), L),
        "b_time": jnp.zeros((1, L), jnp.float32),
        # feature_layer GCN: input_dim = output_dim = channels
        "w_feat": kaiming(keys[2], (C, C), C),
        "b_feat": jnp.zeros((1, C), jnp.float32),
        # mid_projection / output_projection: Conv1d(C, 2C, 1) kaiming init
        "w_mid": kaiming(keys[3], (2 * C, C), C),
        "b_mid": jnp.zeros((2 * C, 1), jnp.float32),
        "w_out": kaiming(keys[4], (2 * C, C), C),
        "b_out": jnp.zeros((2 * C, 1), jnp.float32),
    }


# ---------------------------------------------------------------------------
# Main
# ---------------------------------------------------------------------------

if __name__ == "__main__":
    B, C, J, L, E = 2, 8, 16, 8, 32   # batch, channels, joints, seq_len, diff-emb dim

    key = jax.random.PRNGKey(0)
    kx, ke, kp = jax.random.split(key, 3)
    x = jax.random.normal(kx, (B, C, J, L), jnp.float32)
    diffusion_emb = jax.random.normal(ke, (B, E), jnp.float32)
    params = make_params(kp, C, L, E, J)

    fwd = jax.jit(gcn_residual_block_forward)
    res, skip = fwd(params, x, diffusion_emb)
    jax.block_until_ready((res, skip))

    assert res.shape == (B, C, J, L) and skip.shape == (B, C, J, L)

    res_ref, skip_ref = reference_forward(params, x, diffusion_emb)
    np.testing.assert_allclose(np.asarray(res), np.asarray(res_ref), rtol=1e-3, atol=1e-3)
    np.testing.assert_allclose(np.asarray(skip), np.asarray(skip_ref), rtol=1e-3, atol=1e-3)

    print("KERNEL_OK")
</pallas_src>

<mosaic_0001>
module attributes {stable_mosaic.version = 11 : i64} {
  func.func @fused_block_kernel(%arg0: i32, %arg1: memref<1x8x128xf32, #tpu.memory_space<vmem>>, %arg2: memref<1x8x1xf32, #tpu.memory_space<vmem>>, %arg3: memref<128x128xf32, #tpu.memory_space<vmem>>, %arg4: memref<128x128xf32, #tpu.memory_space<vmem>>, %arg5: memref<1x128xf32, #tpu.memory_space<vmem>>, %arg6: memref<8x8xf32, #tpu.memory_space<vmem>>, %arg7: memref<8x1xf32, #tpu.memory_space<vmem>>, %arg8: memref<16x8xf32, #tpu.memory_space<vmem>>, %arg9: memref<16x1xf32, #tpu.memory_space<vmem>>, %arg10: memref<16x8xf32, #tpu.memory_space<vmem>>, %arg11: memref<16x1xf32, #tpu.memory_space<vmem>>, %arg12: memref<1x8x128xf32, #tpu.memory_space<vmem>>, %arg13: memref<1x8x128xf32, #tpu.memory_space<vmem>>) attributes {dimension_semantics = [#tpu.dimension_semantics<parallel>], iteration_bounds = array<i64: 2>, scalar_prefetch = 0 : i64, scratch_operands = 0 : i64, tpu.core_type = #tpu.core_type<tc>, window_params = [{transform_indices = @transform_0, window_bounds = array<i64: 1, 8, 128>}, {transform_indices = @transform_1, window_bounds = array<i64: 1, 8, 1>}, {pipeline_mode = #tpu.pipeline_mode<synchronous>, transform_indices = @transform_2, window_bounds = array<i64: 128, 128>}, {pipeline_mode = #tpu.pipeline_mode<synchronous>, transform_indices = @transform_3, window_bounds = array<i64: 128, 128>}, {pipeline_mode = #tpu.pipeline_mode<synchronous>, transform_indices = @transform_4, window_bounds = array<i64: 1, 128>}, {pipeline_mode = #tpu.pipeline_mode<synchronous>, transform_indices = @transform_5, window_bounds = array<i64: 8, 8>}, {pipeline_mode = #tpu.pipeline_mode<synchronous>, transform_indices = @transform_6, window_bounds = array<i64: 8, 1>}, {pipeline_mode = #tpu.pipeline_mode<synchronous>, transform_indices = @transform_7, window_bounds = array<i64: 16, 8>}, {pipeline_mode = #tpu.pipeline_mode<synchronous>, transform_indices = @transform_8, window_bounds = array<i64: 16, 1>}, {pipeline_mode = #tpu.pipeline_mode<synchronous>, transform_indices = @transform_9, window_bounds = array<i64: 16, 8>}, {pipeline_mode = #tpu.pipeline_mode<synchronous>, transform_indices = @transform_10, window_bounds = array<i64: 16, 1>}, {transform_indices = @transform_11, window_bounds = array<i64: 1, 8, 128>}, {transform_indices = @transform_12, window_bounds = array<i64: 1, 8, 128>}]} {
    %c0 = arith.constant 0 : index
    %c0_0 = arith.constant 0 : index
    %c0_1 = arith.constant 0 : index
    %0 = vector.load %arg1[%c0, %c0_0, %c0_1] : memref<1x8x128xf32, #tpu.memory_space<vmem>>, vector<1x8x128xf32>
    %1 = vector.shape_cast %0 : vector<1x8x128xf32> to vector<8x128xf32>
    %c0_2 = arith.constant 0 : index
    %c0_3 = arith.constant 0 : index
    %c0_4 = arith.constant 0 : index
    %2 = vector.load %arg2[%c0_2, %c0_3, %c0_4] : memref<1x8x1xf32, #tpu.memory_space<vmem>>, vector<1x8x1xf32>
    %3 = vector.shape_cast %2 : vector<1x8x1xf32> to vector<8x1xf32>
    %4 = vector.broadcast %3 : vector<8x1xf32> to vector<8x128xf32>
    %5 = arith.addf %1, %4 : vector<8x128xf32>
    %c0_5 = arith.constant 0 : index
    %c0_6 = arith.constant 0 : index
    %6 = vector.load %arg3[%c0_5, %c0_6] : memref<128x128xf32, #tpu.memory_space<vmem>>, vector<128x128xf32>
    %cst = arith.constant dense<0.000000e+00> : vector<8x128xf32>
    %7 = tpu.matmul %5, %6, %cst {dimension_numbers = #tpu.dot_dimension_numbers<[1], [0], [0], [1], [0, 0, 1, 1], [], []>} : vector<8x128xf32>, vector<128x128xf32>, vector<8x128xf32> -> vector<8x128xf32>
    %c0_7 = arith.constant 0 : index
    %c0_8 = arith.constant 0 : index
    %8 = vector.load %arg4[%c0_7, %c0_8] : memref<128x128xf32, #tpu.memory_space<vmem>>, vector<128x128xf32>
    %cst_9 = arith.constant dense<0.000000e+00> : vector<8x128xf32>
    %9 = tpu.matmul %7, %8, %cst_9 {dimension_numbers = #tpu.dot_dimension_numbers<[1], [0], [0], [1], [0, 0, 1, 1], [], []>} : vector<8x128xf32>, vector<128x128xf32>, vector<8x128xf32> -> vector<8x128xf32>
    %c0_10 = arith.constant 0 : index
    %c0_11 = arith.constant 0 : index
    %10 = vector.load %arg5[%c0_10, %c0_11] : memref<1x128xf32, #tpu.memory_space<vmem>>, vector<1x128xf32>
    %11 = vector.broadcast %10 : vector<1x128xf32> to vector<8x128xf32>
    %12 = arith.addf %9, %11 : vector<8x128xf32>
    %cst_12 = arith.constant 0.000000e+00 : f32
    %13 = vector.broadcast %cst_12 : f32 to vector<8x128xf32>
    %14 = arith.maximumf %12, %13 : vector<8x128xf32>
    %c0_13 = arith.constant 0 : index
    %c0_14 = arith.constant 0 : index
    %15 = vector.load %arg3[%c0_13, %c0_14] : memref<128x128xf32, #tpu.memory_space<vmem>>, vector<128x128xf32>
    %cst_15 = arith.constant dense<0.000000e+00> : vector<8x128xf32>
    %16 = tpu.matmul %14, %15, %cst_15 {dimension_numbers = #tpu.dot_dimension_numbers<[1], [0], [0], [1], [0, 0, 1, 1], [], []>} : vector<8x128xf32>, vector<128x128xf32>, vector<8x128xf32> -> vector<8x128xf32>
    %c0_16 = arith.constant 0 : index
    %c0_17 = arith.constant 0 : index
    %17 = vector.load %arg6[%c0_16, %c0_17] : memref<8x8xf32, #tpu.memory_space<vmem>>, vector<8x8xf32>
    %cst_18 = arith.constant dense<0.000000e+00> : vector<8x128xf32>
    %18 = tpu.matmul %17, %16, %cst_18 {dimension_numbers = #tpu.dot_dimension_numbers<[1], [0], [0], [1], [0, 0, 1, 1], [], []>} : vector<8x8xf32>, vector<8x128xf32>, vector<8x128xf32> -> vector<8x128xf32>
    %c0_19 = arith.constant 0 : index
    %c0_20 = arith.constant 0 : index
    %19 = vector.load %arg7[%c0_19, %c0_20] : memref<8x1xf32, #tpu.memory_space<vmem>>, vector<8x1xf32>
    %20 = vector.broadcast %19 : vector<8x1xf32> to vector<8x128xf32>
    %21 = arith.addf %18, %20 : vector<8x128xf32>
    %cst_21 = arith.constant 0.000000e+00 : f32
    %22 = vector.broadcast %cst_21 : f32 to vector<8x128xf32>
    %23 = arith.maximumf %21, %22 : vector<8x128xf32>
    %c0_22 = arith.constant 0 : index
    %c0_23 = arith.constant 0 : index
    %24 = vector.load %arg8[%c0_22, %c0_23] : memref<16x8xf32, #tpu.memory_space<vmem>>, vector<16x8xf32>
    %cst_24 = arith.constant dense<0.000000e+00> : vector<16x128xf32>
    %25 = tpu.matmul %24, %23, %cst_24 {dimension_numbers = #tpu.dot_dimension_numbers<[1], [0], [0], [1], [0, 0, 1, 1], [], []>} : vector<16x8xf32>, vector<8x128xf32>, vector<16x128xf32> -> vector<16x128xf32>
    %c0_25 = arith.constant 0 : index
    %c0_26 = arith.constant 0 : index
    %26 = vector.load %arg9[%c0_25, %c0_26] : memref<16x1xf32, #tpu.memory_space<vmem>>, vector<16x1xf32>
    %27 = vector.broadcast %26 : vector<16x1xf32> to vector<16x128xf32>
    %28 = arith.addf %25, %27 : vector<16x128xf32>
    %29 = vector.extract_strided_slice %28 {offsets = [0, 0], sizes = [8, 128], strides = [1, 1]} : vector<16x128xf32> to vector<8x128xf32>
    %30 = arith.negf %29 : vector<8x128xf32>
    %31 = math.exp %30 : vector<8x128xf32>
    %cst_27 = arith.constant 1.000000e+00 : f32
    %32 = vector.broadcast %cst_27 : f32 to vector<8x128xf32>
    %33 = arith.addf %32, %31 : vector<8x128xf32>
    %34 = arith.divf %32, %33 : vector<8x128xf32>
    %35 = vector.extract_strided_slice %28 {offsets = [8, 0], sizes = [8, 128], strides = [1, 1]} : vector<16x128xf32> to vector<8x128xf32>
    %36 = math.tanh %35 : vector<8x128xf32>
    %37 = arith.mulf %34, %36 : vector<8x128xf32>
    %c0_28 = arith.constant 0 : index
    %c0_29 = arith.constant 0 : index
    %38 = vector.load %arg10[%c0_28, %c0_29] : memref<16x8xf32, #tpu.memory_space<vmem>>, vector<16x8xf32>
    %cst_30 = arith.constant dense<0.000000e+00> : vector<16x128xf32>
    %39 = tpu.matmul %38, %37, %cst_30 {dimension_numbers = #tpu.dot_dimension_numbers<[1], [0], [0], [1], [0, 0, 1, 1], [], []>} : vector<16x8xf32>, vector<8x128xf32>, vector<16x128xf32> -> vector<16x128xf32>
    %c0_31 = arith.constant 0 : index
    %c0_32 = arith.constant 0 : index
    %40 = vector.load %arg11[%c0_31, %c0_32] : memref<16x1xf32, #tpu.memory_space<vmem>>, vector<16x1xf32>
    %41 = vector.broadcast %40 : vector<16x1xf32> to vector<16x128xf32>
    %42 = arith.addf %39, %41 : vector<16x128xf32>
    %43 = vector.extract_strided_slice %42 {offsets = [0, 0], sizes = [8, 128], strides = [1, 1]} : vector<16x128xf32> to vector<8x128xf32>
    %44 = arith.addf %1, %43 : vector<8x128xf32>
    %cst_33 = arith.constant 0.707106769 : f32
    %45 = vector.broadcast %cst_33 : f32 to vector<8x128xf32>
    %46 = arith.mulf %44, %45 : vector<8x128xf32>
    %47 = vector.shape_cast %46 : vector<8x128xf32> to vector<1x8x128xf32>
    %c0_34 = arith.constant 0 : index
    %c0_35 = arith.constant 0 : index
    %c0_36 = arith.constant 0 : index
    %48 = vector.load %arg12[%c0_34, %c0_35, %c0_36] : memref<1x8x128xf32, #tpu.memory_space<vmem>>, vector<1x8x128xf32>
    tpu.vector_store %arg12[%c0_34, %c0_35, %c0_36], %47 {strides = array<i32>} : memref<1x8x128xf32, #tpu.memory_space<vmem>>, vector<1x8x128xf32>,
    %49 = vector.extract_strided_slice %42 {offsets = [8, 0], sizes = [8, 128], strides = [1, 1]} : vector<16x128xf32> to vector<8x128xf32>
    %50 = vector.shape_cast %49 : vector<8x128xf32> to vector<1x8x128xf32>
    %c0_37 = arith.constant 0 : index
    %c0_38 = arith.constant 0 : index
    %c0_39 = arith.constant 0 : index
    %51 = vector.load %arg13[%c0_37, %c0_38, %c0_39] : memref<1x8x128xf32, #tpu.memory_space<vmem>>, vector<1x8x128xf32>
    tpu.vector_store %arg13[%c0_37, %c0_38, %c0_39], %50 {strides = array<i32>} : memref<1x8x128xf32, #tpu.memory_space<vmem>>, vector<1x8x128xf32>,
    return
  }
  func.func @transform_0(%arg0: i32) -> (i32, i32, i32) {
    %c0_i32 = arith.constant 0 : i32
    %c0_i32_0 = arith.constant 0 : i32
    %c0_i32_1 = arith.constant 0 : i32
    return %arg0, %c0_i32, %c0_i32_0 : i32, i32, i32
  }
  func.func @transform_1(%arg0: i32) -> (i32, i32, i32) {
    %c0_i32 = arith.constant 0 : i32
    %c0_i32_0 = arith.constant 0 : i32
    %c0_i32_1 = arith.constant 0 : i32
    return %arg0, %c0_i32, %c0_i32_0 : i32, i32, i32
  }
  func.func @transform_2(%arg0: i32) -> (i32, i32) {
    %c0_i32 = arith.constant 0 : i32
    %c0_i32_0 = arith.constant 0 : i32
    %c0_i32_1 = arith.constant 0 : i32
    return %c0_i32, %c0_i32_0 : i32, i32
  }
  func.func @transform_3(%arg0: i32) -> (i32, i32) {
    %c0_i32 = arith.constant 0 : i32
    %c0_i32_0 = arith.constant 0 : i32
    %c0_i32_1 = arith.constant 0 : i32
    return %c0_i32, %c0_i32_0 : i32, i32
  }
  func.func @transform_4(%arg0: i32) -> (i32, i32) {
    %c0_i32 = arith.constant 0 : i32
    %c0_i32_0 = arith.constant 0 : i32
    %c0_i32_1 = arith.constant 0 : i32
    return %c0_i32, %c0_i32_0 : i32, i32
  }
  func.func @transform_5(%arg0: i32) -> (i32, i32) {
    %c0_i32 = arith.constant 0 : i32
    %c0_i32_0 = arith.constant 0 : i32
    %c0_i32_1 = arith.constant 0 : i32
    return %c0_i32, %c0_i32_0 : i32, i32
  }
  func.func @transform_6(%arg0: i32) -> (i32, i32) {
    %c0_i32 = arith.constant 0 : i32
    %c0_i32_0 = arith.constant 0 : i32
    %c0_i32_1 = arith.constant 0 : i32
    return %c0_i32, %c0_i32_0 : i32, i32
  }
  func.func @transform_7(%arg0: i32) -> (i32, i32) {
    %c0_i32 = arith.constant 0 : i32
    %c0_i32_0 = arith.constant 0 : i32
    %c0_i32_1 = arith.constant 0 : i32
    return %c0_i32, %c0_i32_0 : i32, i32
  }
  func.func @transform_8(%arg0: i32) -> (i32, i32) {
    %c0_i32 = arith.constant 0 : i32
    %c0_i32_0 = arith.constant 0 : i32
    %c0_i32_1 = arith.constant 0 : i32
    return %c0_i32, %c0_i32_0 : i32, i32
  }
  func.func @transform_9(%arg0: i32) -> (i32, i32) {
    %c0_i32 = arith.constant 0 : i32
    %c0_i32_0 = arith.constant 0 : i32
    %c0_i32_1 = arith.constant 0 : i32
    return %c0_i32, %c0_i32_0 : i32, i32
  }
  func.func @transform_10(%arg0: i32) -> (i32, i32) {
    %c0_i32 = arith.constant 0 : i32
    %c0_i32_0 = arith.constant 0 : i32
    %c0_i32_1 = arith.constant 0 : i32
    return %c0_i32, %c0_i32_0 : i32, i32
  }
  func.func @transform_11(%arg0: i32) -> (i32, i32, i32) {
    %c0_i32 = arith.constant 0 : i32
    %c0_i32_0 = arith.constant 0 : i32
    %c0_i32_1 = arith.constant 0 : i32
    return %arg0, %c0_i32, %c0_i32_0 : i32, i32, i32
  }
  func.func @transform_12(%arg0: i32) -> (i32, i32, i32) {
    %c0_i32 = arith.constant 0 : i32
    %c0_i32_0 = arith.constant 0 : i32
    %c0_i32_1 = arith.constant 0 : i32
    return %arg0, %c0_i32, %c0_i32_0 : i32, i32, i32
  }
}

</mosaic_0001>

<llo_original>
// kernel: gcn_residual_block_forward.1
$region0: #{gcn_residual_block_forward.1}
  #allocation0 [shape = 'u32[]', space=smem, size = 0x4, offset = 0x4, fixed_abs, tag = 'smem constant byte address 0x4 - core index']
  #allocation1 [shape = 'u32[144,128]{1,0:T(1,128)}', space=vmem, size = 0x12000, scoped, tag = 'internal scratch']
  %s0 = inlined_call_operand.vmem [shape: f32[2,8,128], index: 0, kind: input, shape index: {}]
  %s1 = inlined_call_operand.vmem [shape: f32[2,8,1], index: 1, kind: input, shape index: {}]
  %s2 = inlined_call_operand.vmem [shape: f32[128,128], index: 2, kind: input, shape index: {}]
  %s3 = inlined_call_operand.vmem [shape: f32[128,128], index: 3, kind: input, shape index: {}]
  %s4 = inlined_call_operand.vmem [shape: f32[1,128], index: 4, kind: input, shape index: {}]
  %s5 = inlined_call_operand.vmem [shape: f32[8,8], index: 5, kind: input, shape index: {}]
  %s6 = inlined_call_operand.vmem [shape: f32[8,1], index: 6, kind: input, shape index: {}]
  %s7 = inlined_call_operand.vmem [shape: f32[16,8], index: 7, kind: input, shape index: {}]
  %s8 = inlined_call_operand.vmem [shape: f32[16,1], index: 8, kind: input, shape index: {}]
  %s9 = inlined_call_operand.vmem [shape: f32[16,8], index: 9, kind: input, shape index: {}]
  %s10 = inlined_call_operand.vmem [shape: f32[16,1], index: 10, kind: input, shape index: {}]
  %s11 = inlined_call_operand.vmem [shape: f32[2,8,128], index: 11, kind: output, shape index: {0}]
  %s12 = inlined_call_operand.vmem [shape: f32[2,8,128], index: 12, kind: output, shape index: {1}]
  %13 = xla_tuple %s11, %s12
  %s14 = sld [smem:[#allocation0]]
  $region85: #{gcn_residual_block_forward.1} parent=0
    _
  %s16 = ssub.s32 1, %s14
  %s17 = scalar_select 0, %s16, %s14
  loop: start=0, step=1, limit=4
  $region2: #{gcn_residual_block_forward.1} parent=0 // loop_pre_header
    _
  $region3: #{gcn_residual_block_forward.1} parent=0 // loop_header
    %s19 = sphi 0, %s23
    %p20 = scmp.ge.s32.totalorder %s19, 4
    %s29 = sphi 0, %s31
    %s32 = sphi 0, %s29
    %s33 = sphi 0, %s32
    %s49 = sphi 0, %s33
    %s55 = sphi 0, %s57
    %s58 = sphi 0, %s55
    %s59 = sphi 0, %s58
    %s75 = sphi 0, %s59
    %s79 = sphi 0, %s79
    %s81 = sphi 0, %s79
    %s82 = sphi 0, %s81
    %s96 = sphi 0, %s82
    %s100 = sphi 0, %s100
    %s102 = sphi 0, %s100
    %s103 = sphi 0, %s102
    %s117 = sphi 0, %s103
    %s121 = sphi 0, %s121
    %s123 = sphi 0, %s121
    %s124 = sphi 0, %s123
    %s138 = sphi 0, %s124
    %s142 = sphi 0, %s142
    %s144 = sphi 0, %s142
    %s145 = sphi 0, %s144
    %s159 = sphi 0, %s145
    %s163 = sphi 0, %s163
    %s165 = sphi 0, %s163
    %s166 = sphi 0, %s165
    %s180 = sphi 0, %s166
    %s184 = sphi 0, %s184
    %s186 = sphi 0, %s184
    %s187 = sphi 0, %s186
    %s201 = sphi 0, %s187
    %s205 = sphi 0, %s205
    %s207 = sphi 0, %s205
    %s208 = sphi 0, %s207
    %s222 = sphi 0, %s208
    %s226 = sphi 0, %s226
    %s228 = sphi 0, %s226
    %s229 = sphi 0, %s228
    %s243 = sphi 0, %s229
    %s247 = sphi 0, %s247
    %s249 = sphi 0, %s247
    %s250 = sphi 0, %s249
    %s264 = sphi 0, %s250
    %s270 = sphi 0, %s272
    %s273 = sphi 0, %s270
    %s274 = sphi 0, %s273
    %s290 = sphi 0, %s274
    %s296 = sphi 0, %s298
    %s299 = sphi 0, %s296
    %s300 = sphi 0, %s299
    %s316 = sphi 0, %s300
  $region4: #{gcn_residual_block_forward.1} parent=0 // loop_header_branch
    %22 = sbr.rel (%p20) target = $region8
  $region5: #{gcn_residual_block_forward.1} parent=0 // loop_body
    %s24 = ssub.s32 %s19, 1
    %s25 = ssub.s32 %s19, 2
    %s26 = sadd.s32 %s19, 1
    %s27 = ssub.s32 %s19, %s26
    %p28 = scmp.eq.s32.totalorder %s27, 0
    %s30 = sadd.s32 %s29, 1
    %s31 = scalar_select %p28, %s29, %s30
    %p34 = pneg %p28
    %p35 = scmp.eq.s32.totalorder %s19, 1
    %p36 = por %p34, %p35
    %p37 = scmp.ne.s32.totalorder %s29, %s32
    %p38 = scmp.eq.s32.totalorder %s19, 0
    %p39 = por %p37, %p38
    %p40 = scmp.ne.s32.totalorder %s29, %s32
    %p41 = scmp.eq.s32.totalorder %s24, 1
    %p42 = por %p40, %p41
    %p43 = scmp.ne.s32.totalorder %s32, %s33
    %p44 = scmp.eq.s32.totalorder %s24, 0
    %p45 = por %p43, %p44
    %p46 = scmp.ne.s32.totalorder %s32, %s33
    %p47 = scmp.eq.s32.totalorder %s25, 1
    %p48 = por %p46, %p47
    %p50 = scmp.ne.s32.totalorder %s33, %s49
    %p51 = scmp.eq.s32.totalorder %s25, 0
    %p52 = por %p50, %p51
    %s53 = ssub.s32 %s19, %s26
    %p54 = scmp.eq.s32.totalorder %s53, 0
    %s56 = sadd.s32 %s55, 1
    %s57 = scalar_select %p54, %s55, %s56
    %p60 = pneg %p54
    %p61 = scmp.eq.s32.totalorder %s19, 1
    %p62 = por %p60, %p61
    %p63 = scmp.ne.s32.totalorder %s55, %s58
    %p64 = scmp.eq.s32.totalorder %s19, 0
    %p65 = por %p63, %p64
    %p66 = scmp.ne.s32.totalorder %s55, %s58
    %p67 = scmp.eq.s32.totalorder %s24, 1
    %p68 = por %p66, %p67
    %p69 = scmp.ne.s32.totalorder %s58, %s59
    %p70 = scmp.eq.s32.totalorder %s24, 0
    %p71 = por %p69, %p70
    %p72 = scmp.ne.s32.totalorder %s58, %s59
    %p73 = scmp.eq.s32.totalorder %s25, 1
    %p74 = por %p72, %p73
    %p76 = scmp.ne.s32.totalorder %s59, %s75
    %p77 = scmp.eq.s32.totalorder %s25, 0
    %p78 = por %p76, %p77
    %s80 = sadd.s32 %s79, 1
    %p83 = scmp.eq.s32.totalorder %s19, 1
    %p84 = scmp.ne.s32.totalorder %s79, %s81
    %p85 = scmp.eq.s32.totalorder %s19, 0
    %p86 = por %p84, %p85
    %p87 = scmp.ne.s32.totalorder %s79, %s81
    %p88 = scmp.eq.s32.totalorder %s24, 1
    %p89 = por %p87, %p88
    %p90 = scmp.ne.s32.totalorder %s81, %s82
    %p91 = scmp.eq.s32.totalorder %s24, 0
    %p92 = por %p90, %p91
    %p93 = scmp.ne.s32.totalorder %s81, %s82
    %p94 = scmp.eq.s32.totalorder %s25, 1
    %p95 = por %p93, %p94
    %p97 = scmp.ne.s32.totalorder %s82, %s96
    %p98 = scmp.eq.s32.totalorder %s25, 0
    %p99 = por %p97, %p98
    %s101 = sadd.s32 %s100, 1
    %p104 = scmp.eq.s32.totalorder %s19, 1
    %p105 = scmp.ne.s32.totalorder %s100, %s102
    %p106 = scmp.eq.s32.totalorder %s19, 0
    %p107 = por %p105, %p106
    %p108 = scmp.ne.s32.totalorder %s100, %s102
    %p109 = scmp.eq.s32.totalorder %s24, 1
    %p110 = por %p108, %p109
    %p111 = scmp.ne.s32.totalorder %s102, %s103
    %p112 = scmp.eq.s32.totalorder %s24, 0
    %p113 = por %p111, %p112
    %p114 = scmp.ne.s32.totalorder %s102, %s103
    %p115 = scmp.eq.s32.totalorder %s25, 1
    %p116 = por %p114, %p115
    %p118 = scmp.ne.s32.totalorder %s103, %s117
    %p119 = scmp.eq.s32.totalorder %s25, 0
    %p120 = por %p118, %p119
    %s122 = sadd.s32 %s121, 1
    %p125 = scmp.eq.s32.totalorder %s19, 1
    %p126 = scmp.ne.s32.totalorder %s121, %s123
    %p127 = scmp.eq.s32.totalorder %s19, 0
    %p128 = por %p126, %p127
    %p129 = scmp.ne.s32.totalorder %s121, %s123
    %p130 = scmp.eq.s32.totalorder %s24, 1
    %p131 = por %p129, %p130
    %p132 = scmp.ne.s32.totalorder %s123, %s124
    %p133 = scmp.eq.s32.totalorder %s24, 0
    %p134 = por %p132, %p133
    %p135 = scmp.ne.s32.totalorder %s123, %s124
    %p136 = scmp.eq.s32.totalorder %s25, 1
    %p137 = por %p135, %p136
    %p139 = scmp.ne.s32.totalorder %s124, %s138
    %p140 = scmp.eq.s32.totalorder %s25, 0
    %p141 = por %p139, %p140
    %s143 = sadd.s32 %s142, 1
    %p146 = scmp.eq.s32.totalorder %s19, 1
    %p147 = scmp.ne.s32.totalorder %s142, %s144
    %p148 = scmp.eq.s32.totalorder %s19, 0
    %p149 = por %p147, %p148
    %p150 = scmp.ne.s32.totalorder %s142, %s144
    %p151 = scmp.eq.s32.totalorder %s24, 1
    %p152 = por %p150, %p151
    %p153 = scmp.ne.s32.totalorder %s144, %s145
    %p154 = scmp.eq.s32.totalorder %s24, 0
    %p155 = por %p153, %p154
    %p156 = scmp.ne.s32.totalorder %s144, %s145
    %p157 = scmp.eq.s32.totalorder %s25, 1
    %p158 = por %p156, %p157
    %p160 = scmp.ne.s32.totalorder %s145, %s159
    %p161 = scmp.eq.s32.totalorder %s25, 0
    %p162 = por %p160, %p161
    %s164 = sadd.s32 %s163, 1
    %p167 = scmp.eq.s32.totalorder %s19, 1
    %p168 = scmp.ne.s32.totalorder %s163, %s165
    %p169 = scmp.eq.s32.totalorder %s19, 0
    %p170 = por %p168, %p169
    %p171 = scmp.ne.s32.totalorder %s163, %s165
    %p172 = scmp.eq.s32.totalorder %s24, 1
    %p173 = por %p171, %p172
    %p174 = scmp.ne.s32.totalorder %s165, %s166
    %p175 = scmp.eq.s32.totalorder %s24, 0
    %p176 = por %p174, %p175
    %p177 = scmp.ne.s32.totalorder %s165, %s166
    %p178 = scmp.eq.s32.totalorder %s25, 1
    %p179 = por %p177, %p178
    %p181 = scmp.ne.s32.totalorder %s166, %s180
    %p182 = scmp.eq.s32.totalorder %s25, 0
    %p183 = por %p181, %p182
    %s185 = sadd.s32 %s184, 1
    %p188 = scmp.eq.s32.totalorder %s19, 1
    %p189 = scmp.ne.s32.totalorder %s184, %s186
    %p190 = scmp.eq.s32.totalorder %s19, 0
    %p191 = por %p189, %p190
    %p192 = scmp.ne.s32.totalorder %s184, %s186
    %p193 = scmp.eq.s32.totalorder %s24, 1
    %p194 = por %p192, %p193
    %p195 = scmp.ne.s32.totalorder %s186, %s187
    %p196 = scmp.eq.s32.totalorder %s24, 0
    %p197 = por %p195, %p196
    %p198 = scmp.ne.s32.totalorder %s186, %s187
    %p199 = scmp.eq.s32.totalorder %s25, 1
    %p200 = por %p198, %p199
    %p202 = scmp.ne.s32.totalorder %s187, %s201
    %p203 = scmp.eq.s32.totalorder %s25, 0
    %p204 = por %p202, %p203
    %s206 = sadd.s32 %s205, 1
    %p209 = scmp.eq.s32.totalorder %s19, 1
    %p210 = scmp.ne.s32.totalorder %s205, %s207
    %p211 = scmp.eq.s32.totalorder %s19, 0
    %p212 = por %p210, %p211
    %p213 = scmp.ne.s32.totalorder %s205, %s207
    %p214 = scmp.eq.s32.totalorder %s24, 1
    %p215 = por %p213, %p214
    %p216 = scmp.ne.s32.totalorder %s207, %s208
    %p217 = scmp.eq.s32.totalorder %s24, 0
    %p218 = por %p216, %p217
    %p219 = scmp.ne.s32.totalorder %s207, %s208
    %p220 = scmp.eq.s32.totalorder %s25, 1
    %p221 = por %p219, %p220
    %p223 = scmp.ne.s32.totalorder %s208, %s222
    %p224 = scmp.eq.s32.totalorder %s25, 0
    %p225 = por %p223, %p224
    %s227 = sadd.s32 %s226, 1
    %p230 = scmp.eq.s32.totalorder %s19, 1
    %p231 = scmp.ne.s32.totalorder %s226, %s228
    %p232 = scmp.eq.s32.totalorder %s19, 0
    %p233 = por %p231, %p232
    %p234 = scmp.ne.s32.totalorder %s226, %s228
    %p235 = scmp.eq.s32.totalorder %s24, 1
    %p236 = por %p234, %p235
    %p237 = scmp.ne.s32.totalorder %s228, %s229
    %p238 = scmp.eq.s32.totalorder %s24, 0
    %p239 = por %p237, %p238
    %p240 = scmp.ne.s32.totalorder %s228, %s229
    %p241 = scmp.eq.s32.totalorder %s25, 1
    %p242 = por %p240, %p241
    %p244 = scmp.ne.s32.totalorder %s229, %s243
    %p245 = scmp.eq.s32.totalorder %s25, 0
    %p246 = por %p244, %p245
    %s248 = sadd.s32 %s247, 1
    %p251 = scmp.eq.s32.totalorder %s19, 1
    %p252 = scmp.ne.s32.totalorder %s247, %s249
    %p253 = scmp.eq.s32.totalorder %s19, 0
    %p254 = por %p252, %p253
    %p255 = scmp.ne.s32.totalorder %s247, %s249
    %p256 = scmp.eq.s32.totalorder %s24, 1
    %p257 = por %p255, %p256
    %p258 = scmp.ne.s32.totalorder %s249, %s250
    %p259 = scmp.eq.s32.totalorder %s24, 0
    %p260 = por %p258, %p259
    %p261 = scmp.ne.s32.totalorder %s249, %s250
    %p262 = scmp.eq.s32.totalorder %s25, 1
    %p263 = por %p261, %p262
    %p265 = scmp.ne.s32.totalorder %s250, %s264
    %p266 = scmp.eq.s32.totalorder %s25, 0
    %p267 = por %p265, %p266
    %s268 = ssub.s32 %s19, %s26
    %p269 = scmp.eq.s32.totalorder %s268, 0
    %s271 = sadd.s32 %s270, 1
    %s272 = scalar_select %p269, %s270, %s271
    %p275 = pneg %p269
    %p276 = scmp.eq.s32.totalorder %s19, 1
    %p277 = por %p275, %p276
    %p278 = scmp.ne.s32.totalorder %s270, %s273
    %p279 = scmp.eq.s32.totalorder %s19, 0
    %p280 = por %p278, %p279
    %p281 = scmp.ne.s32.totalorder %s270, %s273
    %p282 = scmp.eq.s32.totalorder %s24, 1
    %p283 = por %p281, %p282
    %p284 = scmp.ne.s32.totalorder %s273, %s274
    %p285 = scmp.eq.s32.totalorder %s24, 0
    %p286 = por %p284, %p285
    %p287 = scmp.ne.s32.totalorder %s273, %s274
    %p288 = scmp.eq.s32.totalorder %s25, 1
    %p289 = por %p287, %p288
    %p291 = scmp.ne.s32.totalorder %s274, %s290
    %p292 = scmp.eq.s32.totalorder %s25, 0
    %p293 = por %p291, %p292
    %s294 = ssub.s32 %s19, %s26
    %p295 = scmp.eq.s32.totalorder %s294, 0
    %s297 = sadd.s32 %s296, 1
    %s298 = scalar_select %p295, %s296, %s297
    %p301 = pneg %p295
    %p302 = scmp.eq.s32.totalorder %s19, 1
    %p303 = por %p301, %p302
    %p304 = scmp.ne.s32.totalorder %s296, %s299
    %p305 = scmp.eq.s32.totalorder %s19, 0
    %p306 = por %p304, %p305
    %p307 = scmp.ne.s32.totalorder %s296, %s299
    %p308 = scmp.eq.s32.totalorder %s24, 1
    %p309 = por %p307, %p308
    %p310 = scmp.ne.s32.totalorder %s299, %s300
    %p311 = scmp.eq.s32.totalorder %s24, 0
    %p312 = por %p310, %p311
    %p313 = scmp.ne.s32.totalorder %s299, %s300
    %p314 = scmp.eq.s32.totalorder %s25, 1
    %p315 = por %p313, %p314
    %p317 = scmp.ne.s32.totalorder %s300, %s316
    %p318 = scmp.eq.s32.totalorder %s25, 0
    %p319 = por %p317, %p318
    %p320 = scmp.le.s32.totalorder 1, %s19
    %p321 = scmp.lt.s32.totalorder %s19, 3
    %p322 = pnand %p320, %p321
    %p323 = pneg %p322
    // Predicated region
    $region9: #{gcn_residual_block_forward.1} parent=5 // pred_check
      _
    $region10: #{gcn_residual_block_forward.1} parent=5 // pred_check_branch
      %325 = sbr.rel (%p322) target = $region12
    $region11: #{gcn_residual_block_forward.1} parent=5 // pred_region
      %s326 = ssub.s32 %s19, 1
      // Predicated region
      $region13: #{gcn_residual_block_forward.1} parent=11 // pred_check
        %p327 = pneg %p92
      $region14: #{gcn_residual_block_forward.1} parent=11 // pred_check_branch
        %329 = sbr.rel (%p327) target = $region16
      $region15: #{gcn_residual_block_forward.1} parent=11 // pred_region
        _
      $region16: #{gcn_residual_block_forward.1} parent=11 // pred_fallthru
        _
      // Predicated region
      $region17: #{gcn_residual_block_forward.1} parent=11 // pred_check
        %p330 = pneg %p113
      $region18: #{gcn_residual_block_forward.1} parent=11 // pred_check_branch
        %332 = sbr.rel (%p330) target = $region20
      $region19: #{gcn_residual_block_forward.1} parent=11 // pred_region
        _
      $region20: #{gcn_residual_block_forward.1} parent=11 // pred_fallthru
        _
      // Predicated region
      $region21: #{gcn_residual_block_forward.1} parent=11 // pred_check
        %p333 = pneg %p134
      $region22: #{gcn_residual_block_forward.1} parent=11 // pred_check_branch
        %335 = sbr.rel (%p333) target = $region24
      $region23: #{gcn_residual_block_forward.1} parent=11 // pred_region
        _
      $region24: #{gcn_residual_block_forward.1} parent=11 // pred_fallthru
        _
      // Predicated region
      $region25: #{gcn_residual_block_forward.1} parent=11 // pred_check
        %p336 = pneg %p155
      $region26: #{gcn_residual_block_forward.1} parent=11 // pred_check_branch
        %338 = sbr.rel (%p336) target = $region28
      $region27: #{gcn_residual_block_forward.1} parent=11 // pred_region
        _
      $region28: #{gcn_residual_block_forward.1} parent=11 // pred_fallthru
        _
      // Predicated region
      $region29: #{gcn_residual_block_forward.1} parent=11 // pred_check
        %p339 = pneg %p176
      $region30: #{gcn_residual_block_forward.1} parent=11 // pred_check_branch
        %341 = sbr.rel (%p339) target = $region32
      $region31: #{gcn_residual_block_forward.1} parent=11 // pred_region
        _
      $region32: #{gcn_residual_block_forward.1} parent=11 // pred_fallthru
        _
      // Predicated region
      $region33: #{gcn_residual_block_forward.1} parent=11 // pred_check
        %p342 = pneg %p197
      $region34: #{gcn_residual_block_forward.1} parent=11 // pred_check_branch
        %344 = sbr.rel (%p342) target = $region36
      $region35: #{gcn_residual_block_forward.1} parent=11 // pred_region
        _
      $region36: #{gcn_residual_block_forward.1} parent=11 // pred_fallthru
        _
      // Predicated region
      $region37: #{gcn_residual_block_forward.1} parent=11 // pred_check
        %p345 = pneg %p218
      $region38: #{gcn_residual_block_forward.1} parent=11 // pred_check_branch
        %347 = sbr.rel (%p345) target = $region40
      $region39: #{gcn_residual_block_forward.1} parent=11 // pred_region
        _
      $region40: #{gcn_residual_block_forward.1} parent=11 // pred_fallthru
        _
      // Predicated region
      $region41: #{gcn_residual_block_forward.1} parent=11 // pred_check
        %p348 = pneg %p239
      $region42: #{gcn_residual_block_forward.1} parent=11 // pred_check_branch
        %350 = sbr.rel (%p348) target = $region44
      $region43: #{gcn_residual_block_forward.1} parent=11 // pred_region
        _
      $region44: #{gcn_residual_block_forward.1} parent=11 // pred_fallthru
        _
      // Predicated region
      $region45: #{gcn_residual_block_forward.1} parent=11 // pred_check
        %p351 = pneg %p260
      $region46: #{gcn_residual_block_forward.1} parent=11 // pred_check_branch
        %353 = sbr.rel (%p351) target = $region48
      $region47: #{gcn_residual_block_forward.1} parent=11 // pred_region
        _
      $region48: #{gcn_residual_block_forward.1} parent=11 // pred_fallthru
        _
    $region12: #{gcn_residual_block_forward.1} parent=5 // pred_fallthru
      _
    %p354 = scmp.lt.s32.totalorder %s19, 2
    // Predicated region
    $region49: #{gcn_residual_block_forward.1} parent=5 // pred_check
      %p355 = pneg %p354
    $region50: #{gcn_residual_block_forward.1} parent=5 // pred_check_branch
      %357 = sbr.rel (%p355) target = $region52
    $region51: #{gcn_residual_block_forward.1} parent=5 // pred_region
      // Predicated region
      $region53: #{gcn_residual_block_forward.1} parent=51 // pred_check
        %p358 = pneg %p39
      $region54: #{gcn_residual_block_forward.1} parent=51 // pred_check_branch
        %360 = sbr.rel (%p358) target = $region56
      $region55: #{gcn_residual_block_forward.1} parent=51 // pred_region
        %p361 = scmp.lt.s32.totalorder %s19, 1
        %s362 = scalar_select %p361, %s19, 1
        %s363 = smul.addr %s362, 8
        %s364 = scalar_lea.vmem %s0, %s363
      $region56: #{gcn_residual_block_forward.1} parent=51 // pred_fallthru
        _
      // Predicated region
      $region57: #{gcn_residual_block_forward.1} parent=51 // pred_check
        %p365 = pneg %p65
      $region58: #{gcn_residual_block_forward.1} parent=51 // pred_check_branch
        %367 = sbr.rel (%p365) target = $region60
      $region59: #{gcn_residual_block_forward.1} parent=51 // pred_region
        %p368 = scmp.lt.s32.totalorder %s19, 1
        %s369 = scalar_select %p368, %s19, 1
        %s370 = smul.addr %s369, 8
        %s371 = scalar_lea.vmem %s1, %s370
      $region60: #{gcn_residual_block_forward.1} parent=51 // pred_fallthru
        _
    $region52: #{gcn_residual_block_forward.1} parent=5 // pred_fallthru
      _
    %p372 = scmp.le.s32.totalorder 1, %s19
    %p373 = scmp.lt.s32.totalorder %s19, 3
    %p374 = pnand %p372, %p373
    %p375 = pneg %p374
    // Predicated region
    $region61: #{gcn_residual_block_forward.1} parent=5 // pred_check
      _
    $region62: #{gcn_residual_block_forward.1} parent=5 // pred_check_branch
      %377 = sbr.rel (%p374) target = $region64
    $region63: #{gcn_residual_block_forward.1} parent=5 // pred_region
      %s378 = ssub.s32 %s19, 1
      %p379 = scmp.lt.s32.totalorder %s24, 1
      %s380 = scalar_select %p379, %s24, 1
      %s381 = smul.addr %s380, 8
      %s382 = scalar_lea.vmem %s0, %s381
      %p383 = pneg %p45
      %p384 = pneg %p42
      %p385 = scmp.lt.s32.totalorder %s24, 1
      %s386 = scalar_select %p385, %s24, 1
      %s387 = smul.addr %s386, 8
      %s388 = scalar_lea.vmem %s1, %s387
      %p389 = pneg %p71
      %p390 = pneg %p68
      %p391 = pneg %p92
      %p392 = pneg %p89
      %p393 = pneg %p113
      %p394 = pneg %p110
      %p395 = pneg %p134
      %p396 = pneg %p131
      %p397 = pneg %p155
      %p398 = pneg %p152
      %p399 = pneg %p176
      %p400 = pneg %p173
      %p401 = pneg %p197
      %p402 = pneg %p194
      %p403 = pneg %p218
      %p404 = pneg %p215
      %p405 = pneg %p239
      %p406 = pneg %p236
      %p407 = pneg %p260
      %p408 = pneg %p257
      %p409 = pneg %p286
      %p410 = pneg %p283
      %p411 = scmp.lt.s32.totalorder %s24, 1
      %s412 = scalar_select %p411, %s24, 1
      %s413 = smul.addr %s412, 8
      %s414 = scalar_lea.vmem %s11, %s413
      %p415 = pneg %p312
      %p416 = pneg %p309
      %p417 = scmp.lt.s32.totalorder %s24, 1
      %s418 = scalar_select %p417, %s24, 1
      %s419 = smul.addr %s418, 8
      %s420 = scalar_lea.vmem %s12, %s419
      %p421 = scmp.lt.s32.totalorder %s24, 1
      %s422 = scalar_select %p421, %s24, 1
      %s423 = smul.addr %s422, 8
      %s424 = scalar_lea.vmem %s0, %s423
      %p425 = scmp.lt.s32.totalorder %s24, 1
      %s426 = scalar_select %p425, %s24, 1
      %s427 = smul.addr %s426, 8
      %s428 = scalar_lea.vmem %s1, %s427
      %p429 = scmp.lt.s32.totalorder %s24, 1
      %s430 = scalar_select %p429, %s24, 1
      %s431 = smul.addr %s430, 8
      %s432 = scalar_lea.vmem %s11, %s431
      %p433 = scmp.lt.s32.totalorder %s24, 1
      %s434 = scalar_select %p433, %s24, 1
      %s435 = smul.addr %s434, 8
      %s436 = scalar_lea.vmem %s12, %s435
      %v437 = vld [vmem:[%s424] sm:$0xff]
      %v438 = vld [vmem:[%s428] sm:$0xff]
      %440 = vset.pattern.permute.xlu0 0
      %441 = vperm.xlu0 %440, %v438
      %v442 = vpop.permute.xlu0 %441
      %v444 = vadd.f32 %v437, %v442
      %v445 = vld [vmem:[%s2] sm:$0xff]
      %v446 = vld [vmem:[%s2 + $0x8] sm:$0xff]
      %v447 = vld [vmem:[%s2 + $0x10] sm:$0xff]
      %v448 = vld [vmem:[%s2 + $0x18] sm:$0xff]
      %v449 = vld [vmem:[%s2 + $0x20] sm:$0xff]
      %v450 = vld [vmem:[%s2 + $0x28] sm:$0xff]
      %v451 = vld [vmem:[%s2 + $0x30] sm:$0xff]
      %v452 = vld [vmem:[%s2 + $0x38] sm:$0xff]
      %v453 = vld [vmem:[%s2 + $0x40] sm:$0xff]
      %v454 = vld [vmem:[%s2 + $0x48] sm:$0xff]
      %v455 = vld [vmem:[%s2 + $0x50] sm:$0xff]
      %v456 = vld [vmem:[%s2 + $0x58] sm:$0xff]
      %v457 = vld [vmem:[%s2 + $0x60] sm:$0xff]
      %v458 = vld [vmem:[%s2 + $0x68] sm:$0xff]
      %v459 = vld [vmem:[%s2 + $0x70] sm:$0xff]
      %v460 = vld [vmem:[%s2 + $0x78] sm:$0xff]
      %461 = vmatprep.subr.mxu0 0.0
      %462 = vmatpush1.msra.mxu0 %v445
      %463 = vmatprep.subr.mxu0 0.0
      %464 = vmatpush1.msra.mxu0 %v446
      %465 = vmatprep.subr.mxu0 0.0
      %466 = vmatpush1.msra.mxu0 %v447
      %467 = vmatprep.subr.mxu0 0.0
      %468 = vmatpush1.msra.mxu0 %v448
      %469 = vmatprep.subr.mxu0 0.0
      %470 = vmatpush1.msra.mxu0 %v449
      %471 = vmatprep.subr.mxu0 0.0
      %472 = vmatpush1.msra.mxu0 %v450
      %473 = vmatprep.subr.mxu0 0.0
      %474 = vmatpush1.msra.mxu0 %v451
      %475 = vmatprep.subr.mxu0 0.0
      %476 = vmatpush1.msra.mxu0 %v452
      %477 = vmatprep.subr.mxu0 0.0
      %478 = vmatpush1.msra.mxu0 %v453
      %479 = vmatprep.subr.mxu0 0.0
      %480 = vmatpush1.msra.mxu0 %v454
      %481 = vmatprep.subr.mxu0 0.0
      %482 = vmatpush1.msra.mxu0 %v455
      %483 = vmatprep.subr.mxu0 0.0
      %484 = vmatpush1.msra.mxu0 %v456
      %485 = vmatprep.subr.mxu0 0.0
      %486 = vmatpush1.msra.mxu0 %v457
      %487 = vmatprep.subr.mxu0 0.0
      %488 = vmatpush1.msra.mxu0 %v458
      %489 = vmatprep.subr.mxu0 0.0
      %490 = vmatpush1.msra.mxu0 %v459
      %491 = vmatprep.subr.mxu0 0.0
      %492 = vmatpush1.msra.mxu0 %v460
      %493 = vmatprep.subr.mxu0 0.0
      %494 = vmatpush1.msra.mxu0 0.0
      %495 = vmatprep.subr.mxu0 0.0
      %496 = vmatpush1.msra.mxu0 0.0
      %497 = vmatprep.subr.mxu0 0.0
      %498 = vmatpush1.msra.mxu0 0.0
      %499 = vmatprep.subr.mxu0 0.0
      %500 = vmatpush1.msra.mxu0 0.0
      %501 = vmatprep.subr.mxu0 0.0
      %502 = vmatpush1.msra.mxu0 0.0
      %503 = vmatprep.subr.mxu0 0.0
      %504 = vmatpush1.msra.mxu0 0.0
      %505 = vmatprep.subr.mxu0 0.0
      %506 = vmatpush1.msra.mxu0 0.0
      %507 = vmatprep.subr.mxu0 0.0
      %508 = vmatpush1.msra.mxu0 0.0
      %509 = vmatprep.subr.mxu0 0.0
      %510 = vmatpush1.msra.mxu0 0.0
      %511 = vmatprep.subr.mxu0 0.0
      %512 = vmatpush1.msra.mxu0 0.0
      %513 = vmatprep.subr.mxu0 0.0
      %514 = vmatpush1.msra.mxu0 0.0
      %515 = vmatprep.subr.mxu0 0.0
      %516 = vmatpush1.msra.mxu0 0.0
      %517 = vmatprep.subr.mxu0 0.0
      %518 = vmatpush1.msra.mxu0 0.0
      %519 = vmatprep.subr.mxu0 0.0
      %520 = vmatpush1.msra.mxu0 0.0
      %521 = vmatprep.subr.mxu0 0.0
      %522 = vmatpush1.msra.mxu0 0.0
      %523 = vmatprep.subr.mxu0 0.0
      %524 = vmatpush1.msra.mxu0 0.0
      %525 = vmatprep.mubr.f32.mxu0 0.0
      %526 = vmatmul.mubr.f32.gmra.mrb[0].mxu0 %v444
      %v527 = vpop.f32.mrb[0].mxu0
      %v528 = vadd.f32 0.0, %v527
      %v529 = vpop.f32.mrb[0].mxu0
      %530 = vdwg.mxu0
      %v531 = vld [vmem:[%s3] sm:$0xff]
      %v532 = vld [vmem:[%s3 + $0x8] sm:$0xff]
      %v533 = vld [vmem:[%s3 + $0x10] sm:$0xff]
      %v534 = vld [vmem:[%s3 + $0x18] sm:$0xff]
      %v535 = vld [vmem:[%s3 + $0x20] sm:$0xff]
      %v536 = vld [vmem:[%s3 + $0x28] sm:$0xff]
      %v537 = vld [vmem:[%s3 + $0x30] sm:$0xff]
      %v538 = vld [vmem:[%s3 + $0x38] sm:$0xff]
      %v539 = vld [vmem:[%s3 + $0x40] sm:$0xff]
      %v540 = vld [vmem:[%s3 + $0x48] sm:$0xff]
      %v541 = vld [vmem:[%s3 + $0x50] sm:$0xff]
      %v542 = vld [vmem:[%s3 + $0x58] sm:$0xff]
      %v543 = vld [vmem:[%s3 + $0x60] sm:$0xff]
      %v544 = vld [vmem:[%s3 + $0x68] sm:$0xff]
      %v545 = vld [vmem:[%s3 + $0x70] sm:$0xff]
      %v546 = vld [vmem:[%s3 + $0x78] sm:$0xff]
      %v547 = vld [vmem:[%s4] sm:$0x1]
      %v549 = vlaneseq
      %v550 = vshrl.u32 %v549, 7
      %v551 = vsub.s32 0, %v550
      %v552 = vrot.slane %v547, %v551
      %554 = vmatprep.subr.mxu0 0.0
      %555 = vmatpush1.msra.mxu0 %v531
      %556 = vmatprep.subr.mxu0 0.0
      %557 = vmatpush1.msra.mxu0 %v532
      %558 = vmatprep.subr.mxu0 0.0
      %559 = vmatpush1.msra.mxu0 %v533
      %560 = vmatprep.subr.mxu0 0.0
      %561 = vmatpush1.msra.mxu0 %v534
      %562 = vmatprep.subr.mxu0 0.0
      %563 = vmatpush1.msra.mxu0 %v535
      %564 = vmatprep.subr.mxu0 0.0
      %565 = vmatpush1.msra.mxu0 %v536
      %566 = vmatprep.subr.mxu0 0.0
      %567 = vmatpush1.msra.mxu0 %v537
      %568 = vmatprep.subr.mxu0 0.0
      %569 = vmatpush1.msra.mxu0 %v538
      %570 = vmatprep.subr.mxu0 0.0
      %571 = vmatpush1.msra.mxu0 %v539
      %572 = vmatprep.subr.mxu0 0.0
      %573 = vmatpush1.msra.mxu0 %v540
      %574 = vmatprep.subr.mxu0 0.0
      %575 = vmatpush1.msra.mxu0 %v541
      %576 = vmatprep.subr.mxu0 0.0
      %577 = vmatpush1.msra.mxu0 %v542
      %578 = vmatprep.subr.mxu0 0.0
      %579 = vmatpush1.msra.mxu0 %v543
      %580 = vmatprep.subr.mxu0 0.0
      %581 = vmatpush1.msra.mxu0 %v544
      %582 = vmatprep.subr.mxu0 0.0
      %583 = vmatpush1.msra.mxu0 %v545
      %584 = vmatprep.subr.mxu0 0.0
      %585 = vmatpush1.msra.mxu0 %v546
      %586 = vmatprep.subr.mxu0 0.0
      %587 = vmatpush1.msra.mxu0 0.0
      %588 = vmatprep.subr.mxu0 0.0
      %589 = vmatpush1.msra.mxu0 0.0
      %590 = vmatprep.subr.mxu0 0.0
      %591 = vmatpush1.msra.mxu0 0.0
      %592 = vmatprep.subr.mxu0 0.0
      %593 = vmatpush1.msra.mxu0 0.0
      %594 = vmatprep.subr.mxu0 0.0
      %595 = vmatpush1.msra.mxu0 0.0
      %596 = vmatprep.subr.mxu0 0.0
      %597 = vmatpush1.msra.mxu0 0.0
      %598 = vmatprep.subr.mxu0 0.0
      %599 = vmatpush1.msra.mxu0 0.0
      %600 = vmatprep.subr.mxu0 0.0
      %601 = vmatpush1.msra.mxu0 0.0
      %602 = vmatprep.subr.mxu0 0.0
      %603 = vmatpush1.msra.mxu0 0.0
      %604 = vmatprep.subr.mxu0 0.0
      %605 = vmatpush1.msra.mxu0 0.0
      %606 = vmatprep.subr.mxu0 0.0
      %607 = vmatpush1.msra.mxu0 0.0
      %608 = vmatprep.subr.mxu0 0.0
      %609 = vmatpush1.msra.mxu0 0.0
      %610 = vmatprep.subr.mxu0 0.0
      %611 = vmatpush1.msra.mxu0 0.0
      %612 = vmatprep.subr.mxu0 0.0
      %613 = vmatpush1.msra.mxu0 0.0
      %614 = vmatprep.subr.mxu0 0.0
      %615 = vmatpush1.msra.mxu0 0.0
      %616 = vmatprep.subr.mxu0 0.0
      %617 = vmatpush1.msra.mxu0 0.0
      %618 = vmatprep.mubr.f32.mxu0 0.0
      %619 = vmatmul.mubr.f32.gmra.mrb[0].mxu0 %v528
      %v620 = vpop.f32.mrb[0].mxu0
      %v621 = vadd.f32 %v552, %v620
      %v622 = vpop.f32.mrb[0].mxu0
      %623 = vdwg.mxu0
      %v624 = vmax.f32 %v621, 0.0
      %625 = vmatprep.subr.mxu0 0.0
      %626 = vmatpush1.msra.mxu0 %v445
      %627 = vmatprep.subr.mxu0 0.0
      %628 = vmatpush1.msra.mxu0 %v446
      %629 = vmatprep.subr.mxu0 0.0
      %630 = vmatpush1.msra.mxu0 %v447
      %631 = vmatprep.subr.mxu0 0.0
      %632 = vmatpush1.msra.mxu0 %v448
      %633 = vmatprep.subr.mxu0 0.0
      %634 = vmatpush1.msra.mxu0 %v449
      %635 = vmatprep.subr.mxu0 0.0
      %636 = vmatpush1.msra.mxu0 %v450
      %637 = vmatprep.subr.mxu0 0.0
      %638 = vmatpush1.msra.mxu0 %v451
      %639 = vmatprep.subr.mxu0 0.0
      %640 = vmatpush1.msra.mxu0 %v452
      %641 = vmatprep.subr.mxu0 0.0
      %642 = vmatpush1.msra.mxu0 %v453
      %643 = vmatprep.subr.mxu0 0.0
      %644 = vmatpush1.msra.mxu0 %v454
      %645 = vmatprep.subr.mxu0 0.0
      %646 = vmatpush1.msra.mxu0 %v455
      %647 = vmatprep.subr.mxu0 0.0
      %648 = vmatpush1.msra.mxu0 %v456
      %649 = vmatprep.subr.mxu0 0.0
      %650 = vmatpush1.msra.mxu0 %v457
      %651 = vmatprep.subr.mxu0 0.0
      %652 = vmatpush1.msra.mxu0 %v458
      %653 = vmatprep.subr.mxu0 0.0
      %654 = vmatpush1.msra.mxu0 %v459
      %655 = vmatprep.subr.mxu0 0.0
      %656 = vmatpush1.msra.mxu0 %v460
      %657 = vmatprep.subr.mxu0 0.0
      %658 = vmatpush1.msra.mxu0 0.0
      %659 = vmatprep.subr.mxu0 0.0
      %660 = vmatpush1.msra.mxu0 0.0
      %661 = vmatprep.subr.mxu0 0.0
      %662 = vmatpush1.msra.mxu0 0.0
      %663 = vmatprep.subr.mxu0 0.0
      %664 = vmatpush1.msra.mxu0 0.0
      %665 = vmatprep.subr.mxu0 0.0
      %666 = vmatpush1.msra.mxu0 0.0
      %667 = vmatprep.subr.mxu0 0.0
      %668 = vmatpush1.msra.mxu0 0.0
      %669 = vmatprep.subr.mxu0 0.0
      %670 = vmatpush1.msra.mxu0 0.0
      %671 = vmatprep.subr.mxu0 0.0
      %672 = vmatpush1.msra.mxu0 0.0
      %673 = vmatprep.subr.mxu0 0.0
      %674 = vmatpush1.msra.mxu0 0.0
      %675 = vmatprep.subr.mxu0 0.0
      %676 = vmatpush1.msra.mxu0 0.0
      %677 = vmatprep.subr.mxu0 0.0
      %678 = vmatpush1.msra.mxu0 0.0
      %679 = vmatprep.subr.mxu0 0.0
      %680 = vmatpush1.msra.mxu0 0.0
      %681 = vmatprep.subr.mxu0 0.0
      %682 = vmatpush1.msra.mxu0 0.0
      %683 = vmatprep.subr.mxu0 0.0
      %684 = vmatpush1.msra.mxu0 0.0
      %685 = vmatprep.subr.mxu0 0.0
      %686 = vmatpush1.msra.mxu0 0.0
      %687 = vmatprep.subr.mxu0 0.0
      %688 = vmatpush1.msra.mxu0 0.0
      %689 = vmatprep.mubr.f32.mxu0 0.0
      %690 = vmatmul.mubr.f32.gmra.mrb[0].mxu0 %v624
      %v691 = vpop.f32.mrb[0].mxu0
      %v692 = vadd.f32 0.0, %v691
      %v693 = vpop.f32.mrb[0].mxu0
      %694 = vdwg.mxu0
      %v695 = vld [vmem:[%s5] sm:$0xff]
      %v696 = vld [vmem:[%s6] sm:$0xff]
      %698 = vset.pattern.permute.xlu0 0
      %699 = vperm.xlu0 %698, %v696
      %v700 = vpop.permute.xlu0 %699
      %vm702 = vcmask 64512
      %v704 = vsel %vm702, %v695, 0
      %706 = vmatprep.subr.mxu0 0.0
      %707 = vmatpush1.msra.mxu0 %v692
      %708 = vmatprep.subr.mxu0 0.0
      %709 = vmatpush1.msra.mxu0 0.0
      %710 = vmatprep.subr.mxu0 0.0
      %711 = vmatpush1.msra.mxu0 0.0
      %712 = vmatprep.subr.mxu0 0.0
      %713 = vmatpush1.msra.mxu0 0.0
      %714 = vmatprep.subr.mxu0 0.0
      %715 = vmatpush1.msra.mxu0 0.0
      %716 = vmatprep.subr.mxu0 0.0
      %717 = vmatpush1.msra.mxu0 0.0
      %718 = vmatprep.subr.mxu0 0.0
      %719 = vmatpush1.msra.mxu0 0.0
      %720 = vmatprep.subr.mxu0 0.0
      %721 = vmatpush1.msra.mxu0 0.0
      %722 = vmatprep.subr.mxu0 0.0
      %723 = vmatpush1.msra.mxu0 0.0
      %724 = vmatprep.subr.mxu0 0.0
      %725 = vmatpush1.msra.mxu0 0.0
      %726 = vmatprep.subr.mxu0 0.0
      %727 = vmatpush1.msra.mxu0 0.0
      %728 = vmatprep.subr.mxu0 0.0
      %729 = vmatpush1.msra.mxu0 0.0
      %730 = vmatprep.subr.mxu0 0.0
      %731 = vmatpush1.msra.mxu0 0.0
      %732 = vmatprep.subr.mxu0 0.0
      %733 = vmatpush1.msra.mxu0 0.0
      %734 = vmatprep.subr.mxu0 0.0
      %735 = vmatpush1.msra.mxu0 0.0
      %736 = vmatprep.subr.mxu0 0.0
      %737 = vmatpush1.msra.mxu0 0.0
      %738 = vmatprep.subr.mxu0 0.0
      %739 = vmatpush1.msra.mxu0 0.0
      %740 = vmatprep.subr.mxu0 0.0
      %741 = vmatpush1.msra.mxu0 0.0
      %742 = vmatprep.subr.mxu0 0.0
      %743 = vmatpush1.msra.mxu0 0.0
      %744 = vmatprep.subr.mxu0 0.0
      %745 = vmatpush1.msra.mxu0 0.0
      %746 = vmatprep.subr.mxu0 0.0
      %747 = vmatpush1.msra.mxu0 0.0
      %748 = vmatprep.subr.mxu0 0.0
      %749 = vmatpush1.msra.mxu0 0.0
      %750 = vmatprep.subr.mxu0 0.0
      %751 = vmatpush1.msra.mxu0 0.0
      %752 = vmatprep.subr.mxu0 0.0
      %753 = vmatpush1.msra.mxu0 0.0
      %754 = vmatprep.subr.mxu0 0.0
      %755 = vmatpush1.msra.mxu0 0.0
      %756 = vmatprep.subr.mxu0 0.0
      %757 = vmatpush1.msra.mxu0 0.0
      %758 = vmatprep.subr.mxu0 0.0
      %759 = vmatpush1.msra.mxu0 0.0
      %760 = vmatprep.subr.mxu0 0.0
      %761 = vmatpush1.msra.mxu0 0.0
      %762 = vmatprep.subr.mxu0 0.0
      %763 = vmatpush1.msra.mxu0 0.0
      %764 = vmatprep.subr.mxu0 0.0
      %765 = vmatpush1.msra.mxu0 0.0
      %766 = vmatprep.subr.mxu0 0.0
      %767 = vmatpush1.msra.mxu0 0.0
      %768 = vmatprep.subr.mxu0 0.0
      %769 = vmatpush1.msra.mxu0 0.0
      %770 = vmatprep.mubr.f32.mxu0 0.0
      %771 = vmatmul.mubr.f32.gmra.mrb[0].mxu0 %v704
      %v772 = vpop.f32.mrb[0].mxu0
      %v773 = vadd.f32 %v700, %v772
      %v774 = vpop.f32.mrb[0].mxu0
      %775 = vdwg.mxu0
      %v776 = vmax.f32 %v773, 0.0
      %v777 = vld [vmem:[%s7] sm:$0xff]
      %v778 = vld [vmem:[%s7 + $0x8] sm:$0xff]
      %v779 = vld [vmem:[%s8] sm:$0xff]
      %v780 = vld [vmem:[%s8 + $0x8] sm:$0xff]
      %782 = vset.pattern.permute.xlu0 0
      %783 = vperm.xlu0 %782, %v779
      %v784 = vpop.permute.xlu0 %783
      %787 = vset.pattern.permute.xlu0 0
      %788 = vperm.xlu0 %787, %v780
      %v789 = vpop.permute.xlu0 %788
      %v792 = vsel %vm702, %v777, 0
      %v795 = vsel %vm702, %v778, 0
      %797 = vmatprep.subr.mxu0 0.0
      %798 = vmatpush1.msra.mxu0 %v776
      %799 = vmatprep.subr.mxu0 0.0
      %800 = vmatpush1.msra.mxu0 0.0
      %801 = vmatprep.subr.mxu0 0.0
      %802 = vmatpush1.msra.mxu0 0.0
      %803 = vmatprep.subr.mxu0 0.0
      %804 = vmatpush1.msra.mxu0 0.0
      %805 = vmatprep.subr.mxu0 0.0
      %806 = vmatpush1.msra.mxu0 0.0
      %807 = vmatprep.subr.mxu0 0.0
      %808 = vmatpush1.msra.mxu0 0.0
      %809 = vmatprep.subr.mxu0 0.0
      %810 = vmatpush1.msra.mxu0 0.0
      %811 = vmatprep.subr.mxu0 0.0
      %812 = vmatpush1.msra.mxu0 0.0
      %813 = vmatprep.subr.mxu0 0.0
      %814 = vmatpush1.msra.mxu0 0.0
      %815 = vmatprep.subr.mxu0 0.0
      %816 = vmatpush1.msra.mxu0 0.0
      %817 = vmatprep.subr.mxu0 0.0
      %818 = vmatpush1.msra.mxu0 0.0
      %819 = vmatprep.subr.mxu0 0.0
      %820 = vmatpush1.msra.mxu0 0.0
      %821 = vmatprep.subr.mxu0 0.0
      %822 = vmatpush1.msra.mxu0 0.0
      %823 = vmatprep.subr.mxu0 0.0
      %824 = vmatpush1.msra.mxu0 0.0
      %825 = vmatprep.subr.mxu0 0.0
      %826 = vmatpush1.msra.mxu0 0.0
      %827 = vmatprep.subr.mxu0 0.0
      %828 = vmatpush1.msra.mxu0 0.0
      %829 = vmatprep.subr.mxu0 0.0
      %830 = vmatpush1.msra.mxu0 0.0
      %831 = vmatprep.subr.mxu0 0.0
      %832 = vmatpush1.msra.mxu0 0.0
      %833 = vmatprep.subr.mxu0 0.0
      %834 = vmatpush1.msra.mxu0 0.0
      %835 = vmatprep.subr.mxu0 0.0
      %836 = vmatpush1.msra.mxu0 0.0
      %837 = vmatprep.subr.mxu0 0.0
      %838 = vmatpush1.msra.mxu0 0.0
      %839 = vmatprep.subr.mxu0 0.0
      %840 = vmatpush1.msra.mxu0 0.0
      %841 = vmatprep.subr.mxu0 0.0
      %842 = vmatpush1.msra.mxu0 0.0
      %843 = vmatprep.subr.mxu0 0.0
      %844 = vmatpush1.msra.mxu0 0.0
      %845 = vmatprep.subr.mxu0 0.0
      %846 = vmatpush1.msra.mxu0 0.0
      %847 = vmatprep.subr.mxu0 0.0
      %848 = vmatpush1.msra.mxu0 0.0
      %849 = vmatprep.subr.mxu0 0.0
      %850 = vmatpush1.msra.mxu0 0.0
      %851 = vmatprep.subr.mxu0 0.0
      %852 = vmatpush1.msra.mxu0 0.0
      %853 = vmatprep.subr.mxu0 0.0
      %854 = vmatpush1.msra.mxu0 0.0
      %855 = vmatprep.subr.mxu0 0.0
      %856 = vmatpush1.msra.mxu0 0.0
      %857 = vmatprep.subr.mxu0 0.0
      %858 = vmatpush1.msra.mxu0 0.0
      %859 = vmatprep.subr.mxu0 0.0
      %860 = vmatpush1.msra.mxu0 0.0
      %861 = vmatprep.mubr.f32.mxu0 0.0
      %862 = vmatmul.mubr.f32.gmra.mrb[0].mxu0 %v792
      %v863 = vpop.f32.mrb[0].mxu0
      %v864 = vadd.f32 %v784, %v863
      %v865 = vpop.f32.mrb[0].mxu0
      %866 = vmatprep.mubr.f32.mxu0 0.0
      %867 = vmatmul.mubr.f32.gmra.mrb[0].mxu0 %v795
      %v868 = vpop.f32.mrb[0].mxu0
      %v869 = vadd.f32 %v789, %v868
      %v870 = vpop.f32.mrb[0].mxu0
      %871 = vdwg.mxu0
      %v872 = vxor.u32 %v864, 2147483648
      %v873 = vmul.f32 %v872, 1.442695
      %v874 = vpow.pop %v873
      %v875 = vadd.f32 %v874, 1.0
      %v876 = vrcp.pop %v875
      %v877 = vmul.f32 1.0, %v876
      %v878 = vtanh.pop %v869
      %v879 = vmul.f32 %v877, %v878
      %v880 = vld [vmem:[%s9] sm:$0xff]
      %v881 = vld [vmem:[%s9 + $0x8] sm:$0xff]
      %v882 = vld [vmem:[%s10] sm:$0xff]
      %v883 = vld [vmem:[%s10 + $0x8] sm:$0xff]
      %885 = vset.pattern.permute.xlu0 0
      %886 = vperm.xlu0 %885, %v882
      %v887 = vpop.permute.xlu0 %886
      %890 = vset.pattern.permute.xlu0 0
      %891 = vperm.xlu0 %890, %v883
      %v892 = vpop.permute.xlu0 %891
      %v895 = vsel %vm702, %v880, 0
      %v898 = vsel %vm702, %v881, 0
      %900 = vmatprep.subr.mxu0 0.0
      %901 = vmatpush1.msra.mxu0 %v879
      %902 = vmatprep.subr.mxu0 0.0
      %903 = vmatpush1.msra.mxu0 0.0
      %904 = vmatprep.subr.mxu0 0.0
      %905 = vmatpush1.msra.mxu0 0.0
      %906 = vmatprep.subr.mxu0 0.0
      %907 = vmatpush1.msra.mxu0 0.0
      %908 = vmatprep.subr.mxu0 0.0
      %909 = vmatpush1.msra.mxu0 0.0
      %910 = vmatprep.subr.mxu0 0.0
      %911 = vmatpush1.msra.mxu0 0.0
      %912 = vmatprep.subr.mxu0 0.0
      %913 = vmatpush1.msra.mxu0 0.0
      %914 = vmatprep.subr.mxu0 0.0
      %915 = vmatpush1.msra.mxu0 0.0
      %916 = vmatprep.subr.mxu0 0.0
      %917 = vmatpush1.msra.mxu0 0.0
      %918 = vmatprep.subr.mxu0 0.0
      %919 = vmatpush1.msra.mxu0 0.0
      %920 = vmatprep.subr.mxu0 0.0
      %921 = vmatpush1.msra.mxu0 0.0
      %922 = vmatprep.subr.mxu0 0.0
      %923 = vmatpush1.msra.mxu0 0.0
      %924 = vmatprep.subr.mxu0 0.0
      %925 = vmatpush1.msra.mxu0 0.0
      %926 = vmatprep.subr.mxu0 0.0
      %927 = vmatpush1.msra.mxu0 0.0
      %928 = vmatprep.subr.mxu0 0.0
      %929 = vmatpush1.msra.mxu0 0.0
      %930 = vmatprep.subr.mxu0 0.0
      %931 = vmatpush1.msra.mxu0 0.0
      %932 = vmatprep.subr.mxu0 0.0
      %933 = vmatpush1.msra.mxu0 0.0
      %934 = vmatprep.subr.mxu0 0.0
      %935 = vmatpush1.msra.mxu0 0.0
      %936 = vmatprep.subr.mxu0 0.0
      %937 = vmatpush1.msra.mxu0 0.0
      %938 = vmatprep.subr.mxu0 0.0
      %939 = vmatpush1.msra.mxu0 0.0
      %940 = vmatprep.subr.mxu0 0.0
      %941 = vmatpush1.msra.mxu0 0.0
      %942 = vmatprep.subr.mxu0 0.0
      %943 = vmatpush1.msra.mxu0 0.0
      %944 = vmatprep.subr.mxu0 0.0
      %945 = vmatpush1.msra.mxu0 0.0
      %946 = vmatprep.subr.mxu0 0.0
      %947 = vmatpush1.msra.mxu0 0.0
      %948 = vmatprep.subr.mxu0 0.0
      %949 = vmatpush1.msra.mxu0 0.0
      %950 = vmatprep.subr.mxu0 0.0
      %951 = vmatpush1.msra.mxu0 0.0
      %952 = vmatprep.subr.mxu0 0.0
      %953 = vmatpush1.msra.mxu0 0.0
      %954 = vmatprep.subr.mxu0 0.0
      %955 = vmatpush1.msra.mxu0 0.0
      %956 = vmatprep.subr.mxu0 0.0
      %957 = vmatpush1.msra.mxu0 0.0
      %958 = vmatprep.subr.mxu0 0.0
      %959 = vmatpush1.msra.mxu0 0.0
      %960 = vmatprep.subr.mxu0 0.0
      %961 = vmatpush1.msra.mxu0 0.0
      %962 = vmatprep.subr.mxu0 0.0
      %963 = vmatpush1.msra.mxu0 0.0
      %964 = vmatprep.mubr.f32.mxu0 0.0
      %965 = vmatmul.mubr.f32.gmra.mrb[0].mxu0 %v895
      %v966 = vpop.f32.mrb[0].mxu0
      %v967 = vadd.f32 %v887, %v966
      %v968 = vpop.f32.mrb[0].mxu0
      %969 = vmatprep.mubr.f32.mxu0 0.0
      %970 = vmatmul.mubr.f32.gmra.mrb[0].mxu0 %v898
      %v971 = vpop.f32.mrb[0].mxu0
      %v972 = vadd.f32 %v892, %v971
      %v973 = vpop.f32.mrb[0].mxu0
      %974 = vdwg.mxu0
      %v975 = vadd.f32 %v437, %v967
      %v976 = vmul.f32 %v975, 0.70710677
      %977 = vst [vmem:[%s432] sm:$0xff] %v976
      %978 = vst [vmem:[%s436] sm:$0xff] %v972
      %p979 = scmp.lt.s32.totalorder %s24, 1
      %s980 = scalar_select %p979, %s24, 1
      %s981 = smul.addr %s980, 8
      %s982 = scalar_lea.vmem %s11, %s981
      %p983 = scmp.lt.s32.totalorder %s24, 1
      %s984 = scalar_select %p983, %s24, 1
      %s985 = smul.addr %s984, 8
      %s986 = scalar_lea.vmem %s12, %s985
      // Predicated region
      $region65: #{gcn_residual_block_forward.1} parent=63 // pred_check
        %p987 = pneg %p283
      $region66: #{gcn_residual_block_forward.1} parent=63 // pred_check_branch
        %989 = sbr.rel (%p987) target = $region68
      $region67: #{gcn_residual_block_forward.1} parent=63 // pred_region
        _
      $region68: #{gcn_residual_block_forward.1} parent=63 // pred_fallthru
        _
      // Predicated region
      $region69: #{gcn_residual_block_forward.1} parent=63 // pred_check
        %p990 = pneg %p309
      $region70: #{gcn_residual_block_forward.1} parent=63 // pred_check_branch
        %992 = sbr.rel (%p990) target = $region72
      $region71: #{gcn_residual_block_forward.1} parent=63 // pred_region
        _
      $region72: #{gcn_residual_block_forward.1} parent=63 // pred_fallthru
        _
    $region64: #{gcn_residual_block_forward.1} parent=5 // pred_fallthru
      _
    %p993 = scmp.le.s32.totalorder 2, %s19
    // Predicated region
    $region73: #{gcn_residual_block_forward.1} parent=5 // pred_check
      %p994 = pneg %p993
    $region74: #{gcn_residual_block_forward.1} parent=5 // pred_check_branch
      %996 = sbr.rel (%p994) target = $region76
    $region75: #{gcn_residual_block_forward.1} parent=5 // pred_region
      %s997 = ssub.s32 %s19, 2
      // Predicated region
      $region77: #{gcn_residual_block_forward.1} parent=75 // pred_check
        %p998 = pneg %p289
      $region78: #{gcn_residual_block_forward.1} parent=75 // pred_check_branch
        %1000 = sbr.rel (%p998) target = $region80
      $region79: #{gcn_residual_block_forward.1} parent=75 // pred_region
        %p1001 = scmp.lt.s32.totalorder %s25, 1
        %s1002 = scalar_select %p1001, %s25, 1
        %s1003 = smul.addr %s1002, 8
        %s1004 = scalar_lea.vmem %s11, %s1003
      $region80: #{gcn_residual_block_forward.1} parent=75 // pred_fallthru
        _
      // Predicated region
      $region81: #{gcn_residual_block_forward.1} parent=75 // pred_check
        %p1005 = pneg %p315
      $region82: #{gcn_residual_block_forward.1} parent=75 // pred_check_branch
        %1007 = sbr.rel (%p1005) target = $region84
      $region83: #{gcn_residual_block_forward.1} parent=75 // pred_region
        %p1008 = scmp.lt.s32.totalorder %s25, 1
        %s1009 = scalar_select %p1008, %s25, 1
        %s1010 = smul.addr %s1009, 8
        %s1011 = scalar_lea.vmem %s12, %s1010
      $region84: #{gcn_residual_block_forward.1} parent=75 // pred_fallthru
        _
    $region76: #{gcn_residual_block_forward.1} parent=5 // pred_fallthru
      _
  $region6: #{gcn_residual_block_forward.1} parent=0 // loop_footer
    %s23 = sadd.s32 1, %s19
  $region7: #{gcn_residual_block_forward.1} parent=0 // loop_footer_branch
    %18 = sbr.rel target = $region3
  $region8: #{gcn_residual_block_forward.1} parent=0 // loop_exit
    _

</llo_original>
